<compile_context>
chip_gen: v7x
topology: tpu7x:2x2x1
jax: 0.10.0
libtpu: 0.0.40
codegen_flags: <defaults>
</compile_context>

<pallas_src>
import jax
import jax.numpy as jnp
from jax.experimental import pallas as pl
from jax.experimental.pallas import tpu as pltpu

_LANES = 128
_TARGET_BLOCK_BYTES = 8 << 20    # ~8 MiB blocks: per-step overhead < ~5% even at
                                 # v7x's ~3.2 TB/s; same byte target for every dtype
_VMEM_HEADROOM = 12 << 20        # compiler scratch / misc headroom


def _clip_kernel(x_ref, o_ref):
    # elementwise hot path: clamp to [-6, 6] on the VPU
    # (integer literals keep the input dtype intact)
    o_ref[...] = jnp.clip(x_ref[...], -6, 6)


def _round_up(x: int, m: int) -> int:
    return ((x + m - 1) // m) * m


def _round_down(x: int, m: int) -> int:
    return (x // m) * m


def _tpu_info():
    """(physical VMEM bytes per core, #TensorCores a 'parallel' axis can shard over)."""
    vmem_bytes = 64 << 20          # conservative default (v7x per-TC)
    num_cores = 1
    try:
        info = pltpu.get_tpu_info()
        vb = int(getattr(info, "vmem_capacity_bytes", 0) or 0)
        if vb > 0:
            vmem_bytes = vb
    except Exception:
        pass
    try:
        dev = jax.devices()[0]
        kind = str(getattr(dev, "device_kind", "")).lower()
        if "v7" in kind:           # 2 TCs per chip on v7x
            num_cores = 2
        nc = getattr(dev, "num_cores", None)
        if isinstance(nc, int) and nc > 0:
            num_cores = max(num_cores, min(nc, 8))
    except Exception:
        pass
    return vmem_bytes, num_cores


def pars_forward(
    normu: jax.Array,
    *,
    target_block_bytes: int = _TARGET_BLOCK_BYTES,
    pallas_min_bytes: int = 4 << 20,   # below this, plain (fusable) jnp.clip wins
    force_pallas: bool = False,
    alias_input: bool = False,         # set True when the caller donates normu
) -> jax.Array:
    """Pallas implementation of Pars.forward(): normu.clip(-6, 6)."""
    orig_shape = normu.shape
    itemsize = jnp.dtype(normu.dtype).itemsize
    total = int(normu.size)

    # Tiny latents (e.g. the default 2x256x8x8 = 128 KiB): custom-call launch
    # overhead dwarfs the memory traffic -> let XLA fuse a plain clip.
    # TODO(synk): when this clamp sits inside a larger jitted graph, prefer the
    # fusable jnp.clip path even for big inputs (fusion beats a perfect kernel).
    if not force_pallas and total * itemsize < pallas_min_bytes:
        return jnp.clip(normu, -6, 6)

    vmem_bytes, num_cores = _tpu_info()

    # dtype-aware sublane multiple: f32 -> 8, bf16 -> 16, int8/fp8 -> 32
    sub = max(8, 32 // itemsize)
    rows = pl.cdiv(total, _LANES)
    rows_aligned = _round_up(rows, sub)      # only sublane alignment, no tile padding
    row_bytes = _LANES * itemsize

    # Tile: constant-byte target (~8 MiB) regardless of dtype, capped so the
    # double-buffered in+out pipeline (4x block) fits this chip's physical VMEM.
    max_block_bytes = max(row_bytes * sub, (vmem_bytes - _VMEM_HEADROOM) // 4)
    tile = _round_up(max(1, target_block_bytes // row_bytes), sub)
    tile_cap = max(sub, _round_down(max_block_bytes // row_bytes, sub))
    tile = min(tile, tile_cap, rows_aligned)

    # Multi-TC parts only: guarantee >= 2 grid steps per TensorCore so the
    # "parallel" axis shards across cores AND each core can overlap the
    # writeback of step i with the fetch of step i+1.  On single-TC chips the
    # grid is a serial loop, so no forced split (avoids extra step overhead).
    if num_cores > 1:
        min_steps = 2 * num_cores
        if rows_aligned >= min_steps * sub:
            tile = min(tile, _round_up(-(-rows_aligned // min_steps), sub))

    grid = pl.cdiv(rows_aligned, tile)       # partial last block handled by Pallas

    flat = normu.reshape(-1)
    pad = rows_aligned * _LANES - total      # <= (sub*128 - 1) elems, i.e. <= 16 KiB
    if pad:
        flat = jnp.pad(flat, (0, pad))       # zeros are clip-invariant
    x2d = flat.reshape(rows_aligned, _LANES)

    # Generation-aware scoped-VMEM request: enough for double-buffered in+out
    # plus headroom, never above physical-minus-headroom.
    block_bytes = tile * row_bytes
    vmem_limit = int(max(16 << 20,
                         min(vmem_bytes - (8 << 20), 4 * block_bytes + (4 << 20))))

    call_kwargs = {}
    if alias_input:
        # Output shape/dtype == input: reuse the input HBM buffer when donated.
        call_kwargs["input_output_aliases"] = {0: 0}

    out2d = pl.pallas_call(
        _clip_kernel,
        out_shape=jax.ShapeDtypeStruct((rows_aligned, _LANES), normu.dtype),
        grid_spec=pltpu.PrefetchScalarGridSpec(
            num_scalar_prefetch=0,
            grid=(grid,),
            in_specs=[pl.BlockSpec((tile, _LANES), lambda i: (i, 0))],
            out_specs=pl.BlockSpec((tile, _LANES), lambda i: (i, 0)),
        ),
        compiler_params=pltpu.CompilerParams(
            dimension_semantics=("parallel",),
            vmem_limit_bytes=vmem_limit,
        ),
        **call_kwargs,
    )(x2d)

    out_flat = out2d.reshape(-1)
    if pad:
        out_flat = out_flat[:total]
    return out_flat.reshape(orig_shape)


def init_normu(key, batch_size: int, side_x: int, side_y: int,
               dtype=jnp.float32) -> jax.Array:
    """Deterministic replica of Pars.__init__ (image=None branch):
       normu = sinh((0.5 + 2.5*u) * arcsinh(0.5 * randn(B, 256, X//16, Y//16)))"""
    k_gauss, k_uni = jax.random.split(key)
    shape = (batch_size, 256, side_x // 16, side_y // 16)
    base = 0.5 * jax.random.normal(k_gauss, shape, dtype=jnp.float32)
    scale = 0.5 + 2.5 * jax.random.uniform(k_uni, (), dtype=jnp.float32)
    return jnp.sinh(scale * jnp.arcsinh(base)).astype(dtype)


if __name__ == "__main__":
    key = jax.random.PRNGKey(0)

    # 1) Small config matching the module default-ish latent: batch=2,
    #    width=height=128 -> latent (2, 256, 8, 8).  Force the Pallas path to
    #    validate the kernel itself at this shape.
    normu_small = init_normu(key, 2, 128, 128)  # (2, 256, 8, 8), f32
    out_small = jax.block_until_ready(pars_forward(normu_small, force_pallas=True))
    ref_small = jnp.clip(normu_small, -6, 6)
    assert out_small.shape == normu_small.shape and out_small.dtype == normu_small.dtype
    assert jnp.allclose(out_small, ref_small), "small: mismatch vs reference clip"

    # Default dispatch for the tiny latent goes through plain jnp.clip.
    out_small_auto = jax.block_until_ready(pars_forward(normu_small))
    assert jnp.allclose(out_small_auto, ref_small)

    # 2) Larger latent that naturally takes the Pallas path with multi-MiB
    #    blocks: batch=4, width=height=512 -> (4, 256, 32, 32), 4 MiB.
    key2 = jax.random.PRNGKey(1)
    normu_big = init_normu(key2, 4, 512, 512)  # (4, 256, 32, 32), f32
    out_big = jax.block_until_ready(pars_forward(normu_big))
    ref_big = jnp.clip(normu_big, -6, 6)
    assert out_big.shape == normu_big.shape and out_big.dtype == normu_big.dtype
    assert jnp.allclose(out_big, ref_big), "big: mismatch vs reference clip"

    # 3) bf16 path exercises the dtype-aware sublane multiple (16-row packing)
    #    and the constant-byte tile sizing.
    normu_bf16 = init_normu(key2, 2, 256, 256, dtype=jnp.bfloat16)  # (2,256,16,16)
    out_bf16 = jax.block_until_ready(pars_forward(normu_bf16, force_pallas=True))
    ref_bf16 = jnp.clip(normu_bf16, -6, 6)
    assert out_bf16.dtype == jnp.bfloat16
    assert jnp.array_equal(out_bf16, ref_bf16), "bf16: mismatch vs reference clip"

    # 4) Ragged / masked-tail path: width=height=144 -> (1, 256, 9, 9),
    #    20736 elems = 162 rows -> sublane pad to 168 rows, and a tiny block
    #    target forces grid=2 with a partial last block (masked stores).
    normu_odd = init_normu(key, 1, 144, 144)  # (1, 256, 9, 9), f32
    out_odd = jax.block_until_ready(
        pars_forward(normu_odd, force_pallas=True, target_block_bytes=64 << 10))
    ref_odd = jnp.clip(normu_odd, -6, 6)
    assert out_odd.shape == normu_odd.shape and out_odd.dtype == normu_odd.dtype
    assert jnp.allclose(out_odd, ref_odd), "odd: mismatch vs reference clip"

    print("KERNEL_OK")
</pallas_src>

<mosaic_0001>
module attributes {stable_mosaic.version = 11 : i64} {
  func.func @_clip_kernel(%arg0: i32, %arg1: memref<256x128xf32, #tpu.memory_space<vmem>>, %arg2: memref<256x128xf32, #tpu.memory_space<vmem>>) attributes {dimension_semantics = [#tpu.dimension_semantics<parallel>], iteration_bounds = array<i64: 1>, scalar_prefetch = 0 : i64, scratch_operands = 0 : i64, tpu.core_type = #tpu.core_type<tc>, window_params = [{transform_indices = @transform_0, window_bounds = array<i64: 256, 128>}, {transform_indices = @transform_1, window_bounds = array<i64: 256, 128>}]} {
    %c0 = arith.constant 0 : index
    %c0_0 = arith.constant 0 : index
    %0 = vector.load %arg1[%c0, %c0_0] : memref<256x128xf32, #tpu.memory_space<vmem>>, vector<256x128xf32>
    %c-6_i32 = arith.constant -6 : i32
    %c6_i32 = arith.constant 6 : i32
    %1 = arith.sitofp %c-6_i32 : i32 to f32
    %2 = vector.broadcast %1 : f32 to vector<256x128xf32>
    %3 = arith.maximumf %2, %0 : vector<256x128xf32>
    %4 = arith.sitofp %c6_i32 : i32 to f32
    %5 = vector.broadcast %4 : f32 to vector<256x128xf32>
    %6 = arith.minimumf %5, %3 : vector<256x128xf32>
    %c0_1 = arith.constant 0 : index
    %c0_2 = arith.constant 0 : index
    %7 = vector.load %arg2[%c0_1, %c0_2] : memref<256x128xf32, #tpu.memory_space<vmem>>, vector<256x128xf32>
    tpu.vector_store %arg2[%c0_1, %c0_2], %6 {strides = array<i32>} : memref<256x128xf32, #tpu.memory_space<vmem>>, vector<256x128xf32>,
    return
  }
  func.func @transform_0(%arg0: i32) -> (i32, i32) {
    %c0_i32 = arith.constant 0 : i32
    %c0_i32_0 = arith.constant 0 : i32
    return %arg0, %c0_i32 : i32, i32
  }
  func.func @transform_1(%arg0: i32) -> (i32, i32) {
    %c0_i32 = arith.constant 0 : i32
    %c0_i32_0 = arith.constant 0 : i32
    return %arg0, %c0_i32 : i32, i32
  }
}

</mosaic_0001>

<llo_original>
// kernel: tpu_custom_call.1
$region0: #{tpu_custom_call.1}
  #allocation0 [shape = 'u32[]', space=smem, size = 0x4, offset = 0x4, fixed_abs, tag = 'smem constant byte address 0x4 - core index']
  #allocation1 [shape = 'u32[144,128]{1,0:T(1,128)}', space=vmem, size = 0x12000, scoped, tag = 'internal scratch']
  %s0 = inlined_call_operand.hbm [shape: f32[256,128], index: 0, kind: input, shape index: {}]
  %s1 = inlined_call_operand.hbm [shape: f32[256,128], index: 1, kind: output, shape index: {}]
  %s2 = sld [smem:[#allocation0]]
  $region18: #{tpu_custom_call.1} parent=0
    _
  %s4 = ssub.s32 1, %s2
  %s5 = scalar_select 0, %s4, %s2
  $region1: #{tpu_custom_call.1} parent=0
    #allocation2 [shape = 'u8[131072]{0}', space=vmem, size = 0x20000, scoped, tag = 'input window, operand 0, single buffered']
    #allocation3 [shape = 's32[1]{0}', space=sflag, size = 0x4, scoped, tag = 'scoped memory for tpu_custom_call.1']
    #allocation4 [shape = 's32[1]{0}', space=sflag, size = 0x4, scoped, tag = 'scoped memory for tpu_custom_call.1']
    #allocation5 [shape = 'u8[131072]{0}', space=vmem, size = 0x20000, scoped, tag = 'output window, operand 0, single buffered']
    %6 = vsyncpa [#allocation3], 0
    %7 = vsyncpa [#allocation4], 0
    // Predicated region
    $region2: #{tpu_custom_call.1} parent=1 // pred_check
      _
    $region3: #{tpu_custom_call.1} parent=1 // pred_check_branch
      %9 = sbr.rel (0) target = $region5
    $region4: #{tpu_custom_call.1} parent=1 // pred_region
      %s11 = ssub.s32 4096, 4096
      %12 = vsyncadd [#allocation3], %s11
      %s13 = sshll.u32 [#allocation2], 4
      %s14 = int_to_ptr.vmem [resolvable:$true] %s13
      %19 = dma.hbm_to_vmem [thread:$0]  %s0, 4096, %s14, [#allocation3], 128, 128, 8
    $region5: #{tpu_custom_call.1} parent=1 // pred_fallthru
      _
    // Predicated region
    $region6: #{tpu_custom_call.1} parent=1 // pred_check
      _
    $region7: #{tpu_custom_call.1} parent=1 // pred_check_branch
      %21 = sbr.rel (0) target = $region9
    $region8: #{tpu_custom_call.1} parent=1 // pred_region
      %22 = dma.done [#allocation3], 4096
    $region9: #{tpu_custom_call.1} parent=1 // pred_fallthru
      _
    %v23 = vld [vmem:[#allocation2] sm:$0xff]
    %v24 = vld [vmem:[#allocation2 + $0x8] sm:$0xff]
    %v25 = vld [vmem:[#allocation2 + $0x10] sm:$0xff]
    %v26 = vld [vmem:[#allocation2 + $0x18] sm:$0xff]
    %v27 = vld [vmem:[#allocation2 + $0x20] sm:$0xff]
    %v28 = vld [vmem:[#allocation2 + $0x28] sm:$0xff]
    %v29 = vld [vmem:[#allocation2 + $0x30] sm:$0xff]
    %v30 = vld [vmem:[#allocation2 + $0x38] sm:$0xff]
    %v31 = vld [vmem:[#allocation2 + $0x40] sm:$0xff]
    %v32 = vld [vmem:[#allocation2 + $0x48] sm:$0xff]
    %v33 = vld [vmem:[#allocation2 + $0x50] sm:$0xff]
    %v34 = vld [vmem:[#allocation2 + $0x58] sm:$0xff]
    %v35 = vld [vmem:[#allocation2 + $0x60] sm:$0xff]
    %v36 = vld [vmem:[#allocation2 + $0x68] sm:$0xff]
    %v37 = vld [vmem:[#allocation2 + $0x70] sm:$0xff]
    %v38 = vld [vmem:[#allocation2 + $0x78] sm:$0xff]
    %v39 = vld [vmem:[#allocation2 + $0x80] sm:$0xff]
    %v40 = vld [vmem:[#allocation2 + $0x88] sm:$0xff]
    %v41 = vld [vmem:[#allocation2 + $0x90] sm:$0xff]
    %v42 = vld [vmem:[#allocation2 + $0x98] sm:$0xff]
    %v43 = vld [vmem:[#allocation2 + $0xa0] sm:$0xff]
    %v44 = vld [vmem:[#allocation2 + $0xa8] sm:$0xff]
    %v45 = vld [vmem:[#allocation2 + $0xb0] sm:$0xff]
    %v46 = vld [vmem:[#allocation2 + $0xb8] sm:$0xff]
    %v47 = vld [vmem:[#allocation2 + $0xc0] sm:$0xff]
    %v48 = vld [vmem:[#allocation2 + $0xc8] sm:$0xff]
    %v49 = vld [vmem:[#allocation2 + $0xd0] sm:$0xff]
    %v50 = vld [vmem:[#allocation2 + $0xd8] sm:$0xff]
    %v51 = vld [vmem:[#allocation2 + $0xe0] sm:$0xff]
    %v52 = vld [vmem:[#allocation2 + $0xe8] sm:$0xff]
    %v53 = vld [vmem:[#allocation2 + $0xf0] sm:$0xff]
    %v54 = vld [vmem:[#allocation2 + $0xf8] sm:$0xff]
    %v55 = vmax.f32 %v23, -6.0
    %v56 = vmax.f32 %v24, -6.0
    %v57 = vmax.f32 %v25, -6.0
    %v58 = vmax.f32 %v26, -6.0
    %v59 = vmax.f32 %v27, -6.0
    %v60 = vmax.f32 %v28, -6.0
    %v61 = vmax.f32 %v29, -6.0
    %v62 = vmax.f32 %v30, -6.0
    %v63 = vmax.f32 %v31, -6.0
    %v64 = vmax.f32 %v32, -6.0
    %v65 = vmax.f32 %v33, -6.0
    %v66 = vmax.f32 %v34, -6.0
    %v67 = vmax.f32 %v35, -6.0
    %v68 = vmax.f32 %v36, -6.0
    %v69 = vmax.f32 %v37, -6.0
    %v70 = vmax.f32 %v38, -6.0
    %v71 = vmax.f32 %v39, -6.0
    %v72 = vmax.f32 %v40, -6.0
    %v73 = vmax.f32 %v41, -6.0
    %v74 = vmax.f32 %v42, -6.0
    %v75 = vmax.f32 %v43, -6.0
    %v76 = vmax.f32 %v44, -6.0
    %v77 = vmax.f32 %v45, -6.0
    %v78 = vmax.f32 %v46, -6.0
    %v79 = vmax.f32 %v47, -6.0
    %v80 = vmax.f32 %v48, -6.0
    %v81 = vmax.f32 %v49, -6.0
    %v82 = vmax.f32 %v50, -6.0
    %v83 = vmax.f32 %v51, -6.0
    %v84 = vmax.f32 %v52, -6.0
    %v85 = vmax.f32 %v53, -6.0
    %v86 = vmax.f32 %v54, -6.0
    %v87 = vmin.f32 %v55, 6.0
    %v88 = vmin.f32 %v56, 6.0
    %v89 = vmin.f32 %v57, 6.0
    %v90 = vmin.f32 %v58, 6.0
    %v91 = vmin.f32 %v59, 6.0
    %v92 = vmin.f32 %v60, 6.0
    %v93 = vmin.f32 %v61, 6.0
    %v94 = vmin.f32 %v62, 6.0
    %v95 = vmin.f32 %v63, 6.0
    %v96 = vmin.f32 %v64, 6.0
    %v97 = vmin.f32 %v65, 6.0
    %v98 = vmin.f32 %v66, 6.0
    %v99 = vmin.f32 %v67, 6.0
    %v100 = vmin.f32 %v68, 6.0
    %v101 = vmin.f32 %v69, 6.0
    %v102 = vmin.f32 %v70, 6.0
    %v103 = vmin.f32 %v71, 6.0
    %v104 = vmin.f32 %v72, 6.0
    %v105 = vmin.f32 %v73, 6.0
    %v106 = vmin.f32 %v74, 6.0
    %v107 = vmin.f32 %v75, 6.0
    %v108 = vmin.f32 %v76, 6.0
    %v109 = vmin.f32 %v77, 6.0
    %v110 = vmin.f32 %v78, 6.0
    %v111 = vmin.f32 %v79, 6.0
    %v112 = vmin.f32 %v80, 6.0
    %v113 = vmin.f32 %v81, 6.0
    %v114 = vmin.f32 %v82, 6.0
    %v115 = vmin.f32 %v83, 6.0
    %v116 = vmin.f32 %v84, 6.0
    %v117 = vmin.f32 %v85, 6.0
    %v118 = vmin.f32 %v86, 6.0
    %119 = vst [vmem:[#allocation5] sm:$0xff] %v87
    %120 = vst [vmem:[#allocation5 + $0x8] sm:$0xff] %v88
    %121 = vst [vmem:[#allocation5 + $0x10] sm:$0xff] %v89
    %122 = vst [vmem:[#allocation5 + $0x18] sm:$0xff] %v90
    %123 = vst [vmem:[#allocation5 + $0x20] sm:$0xff] %v91
    %124 = vst [vmem:[#allocation5 + $0x28] sm:$0xff] %v92
    %125 = vst [vmem:[#allocation5 + $0x30] sm:$0xff] %v93
    %126 = vst [vmem:[#allocation5 + $0x38] sm:$0xff] %v94
    %127 = vst [vmem:[#allocation5 + $0x40] sm:$0xff] %v95
    %128 = vst [vmem:[#allocation5 + $0x48] sm:$0xff] %v96
    %129 = vst [vmem:[#allocation5 + $0x50] sm:$0xff] %v97
    %130 = vst [vmem:[#allocation5 + $0x58] sm:$0xff] %v98
    %131 = vst [vmem:[#allocation5 + $0x60] sm:$0xff] %v99
    %132 = vst [vmem:[#allocation5 + $0x68] sm:$0xff] %v100
    %133 = vst [vmem:[#allocation5 + $0x70] sm:$0xff] %v101
    %134 = vst [vmem:[#allocation5 + $0x78] sm:$0xff] %v102
    %135 = vst [vmem:[#allocation5 + $0x80] sm:$0xff] %v103
    %136 = vst [vmem:[#allocation5 + $0x88] sm:$0xff] %v104
    %137 = vst [vmem:[#allocation5 + $0x90] sm:$0xff] %v105
    %138 = vst [vmem:[#allocation5 + $0x98] sm:$0xff] %v106
    %139 = vst [vmem:[#allocation5 + $0xa0] sm:$0xff] %v107
    %140 = vst [vmem:[#allocation5 + $0xa8] sm:$0xff] %v108
    %141 = vst [vmem:[#allocation5 + $0xb0] sm:$0xff] %v109
    %142 = vst [vmem:[#allocation5 + $0xb8] sm:$0xff] %v110
    %143 = vst [vmem:[#allocation5 + $0xc0] sm:$0xff] %v111
    %144 = vst [vmem:[#allocation5 + $0xc8] sm:$0xff] %v112
    %145 = vst [vmem:[#allocation5 + $0xd0] sm:$0xff] %v113
    %146 = vst [vmem:[#allocation5 + $0xd8] sm:$0xff] %v114
    %147 = vst [vmem:[#allocation5 + $0xe0] sm:$0xff] %v115
    %148 = vst [vmem:[#allocation5 + $0xe8] sm:$0xff] %v116
    %149 = vst [vmem:[#allocation5 + $0xf0] sm:$0xff] %v117
    %150 = vst [vmem:[#allocation5 + $0xf8] sm:$0xff] %v118
    // Predicated region
    $region10: #{tpu_custom_call.1} parent=1 // pred_check
      _
    $region11: #{tpu_custom_call.1} parent=1 // pred_check_branch
      %152 = sbr.rel (0) target = $region13
    $region12: #{tpu_custom_call.1} parent=1 // pred_region
      %s154 = ssub.s32 4096, 4096
      %155 = vsyncadd [#allocation4], %s154
      %s156 = sshll.u32 [#allocation5], 4
      %s157 = int_to_ptr.vmem [resolvable:$true] %s156
      %162 = dma.vmem_to_hbm [thread:$0]  %s157, 4096, %s1, [#allocation4], 128, 128, 8
    $region13: #{tpu_custom_call.1} parent=1 // pred_fallthru
      _
    // Predicated region
    $region14: #{tpu_custom_call.1} parent=1 // pred_check
      _
    $region15: #{tpu_custom_call.1} parent=1 // pred_check_branch
      %164 = sbr.rel (0) target = $region17
    $region16: #{tpu_custom_call.1} parent=1 // pred_region
      %165 = dma.done [#allocation4], 4096
    $region17: #{tpu_custom_call.1} parent=1 // pred_fallthru
      _
    %166 = vsyncpa [#allocation3], 1
    %167 = vsyncpa [#allocation4], 1

</llo_original>
